<compile_context>
chip_gen: v6e
topology: v6e:2x2x1
jax: 0.10.0
libtpu: 0.0.40
codegen_flags: <defaults>
</compile_context>

<pallas_src>
import functools

import jax
import jax.numpy as jnp
from jax.experimental import pallas as pl
from jax.experimental.pallas import tpu as pltpu

KSIZE = 5
PAD = 2


def _branch2_kernel(x_ref, w1_ref, b1_ref, w2_ref, b2_ref, o_ref, *,
                    stride, length, l_out, lanes, phases):
    """One lane-block: (C_out, lanes) outputs, lanes = (batch tile) * l_out (padded)."""
    # Per-lane output position q within its sample. Lanes beyond the real data
    # (128-padding) produce harmless finite junk that the wrapper slices away.
    q = jax.lax.broadcasted_iota(jnp.int32, (1, lanes), 1) % l_out

    b1 = b1_ref[...]          # (C_out, 1)
    b2 = b2_ref[...]          # (C_out, 1)
    w2 = w2_ref[...]          # (C_out, KSIZE), BN2 scale already folded in

    # Pointwise conv (k=1) + folded BN1 + ReLU: one lane-dense MXU matmul per
    # stride phase.  (Kept f32; cast operands to bf16 here on v6e/v7x if the
    # channel dims grow MXU-sized and ~1e-2 rel tolerance is acceptable.)
    h = {}
    for i, r in enumerate(phases):
        hr = jnp.dot(w1_ref[...], x_ref[i], preferred_element_type=jnp.float32)
        h[r] = jnp.maximum(hr + b1, 0.0)                      # (C_out, lanes)

    # Depthwise conv (k=5, pad=2, stride) as 5 taps: XLU rolls + VPU MACs.
    # Tap k reads h[stride*q + k - PAD]; masks implement the zero padding and
    # also kill any cross-sample / wrap-around leakage from the roll.
    acc = jnp.zeros(o_ref.shape, jnp.float32)
    for k in range(KSIZE):
        d = k - PAD
        r = d % stride            # which phase holds this tap
        m = d // stride           # lane offset within that phase (floor div)
        src = h[r]
        if m != 0:
            src = pltpu.roll(src, (-m) % lanes, axis=1)       # src[j] <- h[r][j + m]
        pos = stride * q + d
        mask = ((pos >= 0) & (pos < length)).astype(jnp.float32)   # (1, lanes)
        acc = acc + w2[:, k:k + 1] * (src * mask)

    # Folded BN2 bias + ReLU, single full-width store.
    o_ref[...] = jnp.maximum(acc + b2, 0.0).astype(o_ref.dtype)


def _choose_lane_tile(n, l_out, target_lanes=2048):
    """Pick a batch tile so each block's lane extent is dense and 128-aligned."""
    nl = n * l_out
    if nl <= target_lanes or nl % 128 != 0:
        return n                      # single lane block (padded to 128 in wrapper)
    best = n
    for bt in range(1, n):
        if n % bt == 0 and (bt * l_out) % 128 == 0 and bt * l_out <= target_lanes:
            best = bt                 # keep the largest qualifying tile <= target
    return best


def branch_2(x, w1, bn1, w2, bn2, stride):
    """x: (N, C_in, L) float32.  Returns (N, C_out, floor((L-1)/stride)+1)."""
    n, c_in, length = x.shape
    c_out = w1.shape[0]
    g1, be1, m1, v1 = bn1
    g2, be2, m2, v2 = bn2
    eps = 1e-5

    # Fold BN (eval mode) scale directly into the conv weights -- free, done once.
    inv1 = g1 / jnp.sqrt(v1 + eps)
    inv2 = g2 / jnp.sqrt(v2 + eps)
    w1_f = (w1.reshape(c_out, c_in) * inv1[:, None]).astype(jnp.float32)
    w2_f = (w2.reshape(c_out, KSIZE) * inv2[:, None]).astype(jnp.float32)
    b1 = (be1 - m1 * inv1).reshape(c_out, 1).astype(jnp.float32)
    b2 = (be2 - m2 * inv2).reshape(c_out, 1).astype(jnp.float32)

    l_out = (length - 1) // stride + 1
    phases = tuple(sorted({(k - PAD) % stride for k in range(KSIZE)}))
    n_ph = len(phases)

    # De-interleave x by output phase (layout plumbing in plain XLA) so the strided
    # depthwise conv becomes stride-1 rolls over a lane-dense fused batch*l_out axis.
    cols = []
    for r in phases:
        xr = x[:, :, r::stride]                       # (N, C_in, ceil((L-r)/stride))
        pad = l_out - xr.shape[-1]
        if pad:
            xr = jnp.pad(xr, ((0, 0), (0, 0), (0, pad)))
        cols.append(xr)
    x_ph = jnp.stack(cols, axis=0)                    # (n_ph, N, C_in, l_out)
    x_ph = x_ph.transpose(0, 2, 1, 3).reshape(n_ph, c_in, n * l_out)

    nl = n * l_out
    b_tile = _choose_lane_tile(n, l_out)
    if b_tile == n:
        lanes = -(-nl // 128) * 128                   # pad to full-vreg lane width
        num_blocks = 1
    else:
        lanes = b_tile * l_out                        # already a multiple of 128
        num_blocks = n // b_tile
    nl_pad = lanes * num_blocks
    if nl_pad != nl:
        x_ph = jnp.pad(x_ph, ((0, 0), (0, 0), (0, nl_pad - nl)))

    kern = functools.partial(
        _branch2_kernel, stride=stride, length=length, l_out=l_out,
        lanes=lanes, phases=phases)

    # Explicit (modest) VMEM budget: safe for v7x's 64 MiB while leaving headroom.
    blk_bytes = 4 * (n_ph * c_in + c_out) * lanes
    vmem_limit = int(min(64 * 2**20, max(16 * 2**20, 6 * blk_bytes)))

    x_spec_kwargs = {}
    if num_blocks >= 4:
        # Deeper input buffering hides prefetch DMA on low-HBM-BW parts (v5e).
        x_spec_kwargs = dict(pipeline_mode=pl.Buffered(3))
    x_spec = pl.BlockSpec((n_ph, c_in, lanes), lambda i: (0, 0, i), **x_spec_kwargs)

    y_flat = pl.pallas_call(
        kern,
        out_shape=jax.ShapeDtypeStruct((c_out, nl_pad), x.dtype),
        grid=(num_blocks,),
        in_specs=[
            x_spec,
            pl.BlockSpec((c_out, c_in), lambda i: (0, 0)),
            pl.BlockSpec((c_out, 1), lambda i: (0, 0)),
            pl.BlockSpec((c_out, KSIZE), lambda i: (0, 0)),
            pl.BlockSpec((c_out, 1), lambda i: (0, 0)),
        ],
        out_specs=pl.BlockSpec((c_out, lanes), lambda i: (0, i)),
        compiler_params=pltpu.CompilerParams(
            dimension_semantics=("parallel",),
            vmem_limit_bytes=vmem_limit),
    )(x_ph, w1_f, b1, w2_f, b2)

    # Back to the PyTorch NCW layout (wrapper-side layout plumbing only).
    y = y_flat[:, :nl].reshape(c_out, n, l_out)
    return jnp.transpose(y, (1, 0, 2))


def _reference(x, w1, bn1, w2, bn2, stride):
    """Pure-JAX reference matching the PyTorch forward (BN in eval mode)."""
    eps = 1e-5
    (g1, be1, m1, v1) = bn1
    (g2, be2, m2, v2) = bn2
    c_out = w1.shape[0]
    h = jnp.einsum('oc,ncl->nol', w1.reshape(c_out, w1.shape[1]), x)
    h = (h - m1[None, :, None]) / jnp.sqrt(v1[None, :, None] + eps) \
        * g1[None, :, None] + be1[None, :, None]
    h = jnp.maximum(h, 0.0)
    hp = jnp.pad(h, ((0, 0), (0, 0), (PAD, PAD)))
    L = x.shape[-1]
    l_out = (L - 1) // stride + 1
    acc = jnp.zeros((x.shape[0], c_out, l_out), jnp.float32)
    for k in range(KSIZE):
        sl = hp[:, :, k:k + (l_out - 1) * stride + 1:stride]
        acc = acc + w2[:, 0, k][None, :, None] * sl
    y = (acc - m2[None, :, None]) / jnp.sqrt(v2[None, :, None] + eps) \
        * g2[None, :, None] + be2[None, :, None]
    return jnp.maximum(y, 0.0)


if __name__ == "__main__":
    # Small shapes consistent with the module: N=2, in_planes=4, out_planes=8,
    # seq length L=16, stride=2.
    N, C_IN, C_OUT, L, STRIDE = 2, 4, 8, 16, 2

    key = jax.random.PRNGKey(0)
    k_x, k_w1, k_w2, k_g1, k_b1, k_m1, k_v1, k_g2, k_b2, k_m2, k_v2 = \
        jax.random.split(key, 11)

    x = jax.random.normal(k_x, (N, C_IN, L), dtype=jnp.float32)

    # Conv1d(k=1, bias=False): weight (C_out, C_in, 1)
    w1 = jax.random.normal(k_w1, (C_OUT, C_IN, 1), dtype=jnp.float32) * 0.3
    # Depthwise Conv1d(k=5, groups=C_out, bias=False): weight (C_out, 1, 5)
    w2 = jax.random.normal(k_w2, (C_OUT, 1, KSIZE), dtype=jnp.float32) * 0.3

    # Deterministic BatchNorm params + running stats (inference mode).
    bn1 = (jax.random.uniform(k_g1, (C_OUT,), minval=0.5, maxval=1.5),
           jax.random.normal(k_b1, (C_OUT,)) * 0.1,
           jax.random.normal(k_m1, (C_OUT,)) * 0.1,
           jax.random.uniform(k_v1, (C_OUT,), minval=0.5, maxval=1.5))
    bn2 = (jax.random.uniform(k_g2, (C_OUT,), minval=0.5, maxval=1.5),
           jax.random.normal(k_b2, (C_OUT,)) * 0.1,
           jax.random.normal(k_m2, (C_OUT,)) * 0.1,
           jax.random.uniform(k_v2, (C_OUT,), minval=0.5, maxval=1.5))

    out = branch_2(x, w1, bn1, w2, bn2, STRIDE)
    out = jax.block_until_ready(out)

    ref = _reference(x, w1, bn1, w2, bn2, STRIDE)
    assert out.shape == ref.shape == (N, C_OUT, (L - 1) // STRIDE + 1), out.shape
    assert jnp.allclose(out, ref, atol=1e-4, rtol=1e-4), \
        f"max err {jnp.max(jnp.abs(out - ref))}"

    print("KERNEL_OK")
</pallas_src>

<mosaic_0001>
module attributes {stable_mosaic.version = 11 : i64} {
  func.func @_branch2_kernel(%arg0: i32, %arg1: memref<2x4x128xf32, #tpu.memory_space<vmem>>, %arg2: memref<8x4xf32, #tpu.memory_space<vmem>>, %arg3: memref<8x1xf32, #tpu.memory_space<vmem>>, %arg4: memref<8x5xf32, #tpu.memory_space<vmem>>, %arg5: memref<8x1xf32, #tpu.memory_space<vmem>>, %arg6: memref<8x128xf32, #tpu.memory_space<vmem>>) attributes {dimension_semantics = [#tpu.dimension_semantics<parallel>], iteration_bounds = array<i64: 1>, scalar_prefetch = 0 : i64, scratch_operands = 0 : i64, tpu.core_type = #tpu.core_type<tc>, window_params = [{transform_indices = @transform_0, window_bounds = array<i64: 2, 4, 128>}, {pipeline_mode = #tpu.pipeline_mode<synchronous>, transform_indices = @transform_1, window_bounds = array<i64: 8, 4>}, {pipeline_mode = #tpu.pipeline_mode<synchronous>, transform_indices = @transform_2, window_bounds = array<i64: 8, 1>}, {pipeline_mode = #tpu.pipeline_mode<synchronous>, transform_indices = @transform_3, window_bounds = array<i64: 8, 5>}, {pipeline_mode = #tpu.pipeline_mode<synchronous>, transform_indices = @transform_4, window_bounds = array<i64: 8, 1>}, {transform_indices = @transform_5, window_bounds = array<i64: 8, 128>}]} {
    %0 = tpu.iota {dimensions = array<i32: 1>} : vector<1x128xi32>
    %c8_i32 = arith.constant 8 : i32
    %c0_i32 = arith.constant 0 : i32
    %1 = arith.cmpi eq, %c8_i32, %c0_i32 : i32
    %c1_i32 = arith.constant 1 : i32
    %2 = arith.select %1, %c1_i32, %c8_i32 : i32
    %3 = vector.broadcast %2 : i32 to vector<1x128xi32>
    %4 = arith.remsi %0, %3 : vector<1x128xi32>
    %c0_i32_0 = arith.constant 0 : i32
    %5 = vector.broadcast %c0_i32_0 : i32 to vector<1x128xi32>
    %6 = arith.cmpi ne, %4, %5 : vector<1x128xi32>
    %c0_i32_1 = arith.constant 0 : i32
    %7 = vector.broadcast %c0_i32_1 : i32 to vector<1x128xi32>
    %8 = arith.cmpi slt, %4, %7 : vector<1x128xi32>
    %c0_i32_2 = arith.constant 0 : i32
    %9 = arith.cmpi slt, %2, %c0_i32_2 : i32
    %10 = vector.broadcast %9 : i1 to vector<1x128xi1>
    %11 = vector.broadcast %10 : vector<1x128xi1> to vector<1x128xi1>
    %12 = arith.xori %8, %11 : vector<1x128xi1>
    %13 = arith.andi %12, %6 : vector<1x128xi1>
    %14 = vector.broadcast %2 : i32 to vector<1x128xi32>
    %15 = arith.addi %4, %14 : vector<1x128xi32>
    %16 = arith.select %13, %15, %4 : vector<1x128xi1>, vector<1x128xi32>
    %c0 = arith.constant 0 : index
    %c0_3 = arith.constant 0 : index
    %17 = vector.load %arg3[%c0, %c0_3] : memref<8x1xf32, #tpu.memory_space<vmem>>, vector<8x1xf32>
    %c0_4 = arith.constant 0 : index
    %c0_5 = arith.constant 0 : index
    %18 = vector.load %arg5[%c0_4, %c0_5] : memref<8x1xf32, #tpu.memory_space<vmem>>, vector<8x1xf32>
    %c0_6 = arith.constant 0 : index
    %c0_7 = arith.constant 0 : index
    %19 = vector.load %arg4[%c0_6, %c0_7] : memref<8x5xf32, #tpu.memory_space<vmem>>, vector<8x5xf32>
    %c0_8 = arith.constant 0 : index
    %c0_9 = arith.constant 0 : index
    %20 = vector.load %arg2[%c0_8, %c0_9] : memref<8x4xf32, #tpu.memory_space<vmem>>, vector<8x4xf32>
    %c0_10 = arith.constant 0 : index
    %c0_11 = arith.constant 0 : index
    %c0_12 = arith.constant 0 : index
    %21 = vector.load %arg1[%c0_10, %c0_11, %c0_12] : memref<2x4x128xf32, #tpu.memory_space<vmem>>, vector<1x4x128xf32>
    %22 = vector.shape_cast %21 : vector<1x4x128xf32> to vector<4x128xf32>
    %cst = arith.constant dense<0.000000e+00> : vector<8x128xf32>
    %23 = tpu.matmul %20, %22, %cst {dimension_numbers = #tpu.dot_dimension_numbers<[1], [0], [0], [1], [0, 0, 1, 1], [], []>} : vector<8x4xf32>, vector<4x128xf32>, vector<8x128xf32> -> vector<8x128xf32>
    %24 = vector.broadcast %17 : vector<8x1xf32> to vector<8x128xf32>
    %25 = arith.addf %23, %24 : vector<8x128xf32>
    %cst_13 = arith.constant 0.000000e+00 : f32
    %26 = vector.broadcast %cst_13 : f32 to vector<8x128xf32>
    %27 = arith.maximumf %25, %26 : vector<8x128xf32>
    %c0_14 = arith.constant 0 : index
    %c0_15 = arith.constant 0 : index
    %28 = vector.load %arg2[%c0_14, %c0_15] : memref<8x4xf32, #tpu.memory_space<vmem>>, vector<8x4xf32>
    %c1 = arith.constant 1 : index
    %c0_16 = arith.constant 0 : index
    %c0_17 = arith.constant 0 : index
    %29 = vector.load %arg1[%c1, %c0_16, %c0_17] : memref<2x4x128xf32, #tpu.memory_space<vmem>>, vector<1x4x128xf32>
    %30 = vector.shape_cast %29 : vector<1x4x128xf32> to vector<4x128xf32>
    %cst_18 = arith.constant dense<0.000000e+00> : vector<8x128xf32>
    %31 = tpu.matmul %28, %30, %cst_18 {dimension_numbers = #tpu.dot_dimension_numbers<[1], [0], [0], [1], [0, 0, 1, 1], [], []>} : vector<8x4xf32>, vector<4x128xf32>, vector<8x128xf32> -> vector<8x128xf32>
    %32 = vector.broadcast %17 : vector<8x1xf32> to vector<8x128xf32>
    %33 = arith.addf %31, %32 : vector<8x128xf32>
    %cst_19 = arith.constant 0.000000e+00 : f32
    %34 = vector.broadcast %cst_19 : f32 to vector<8x128xf32>
    %35 = arith.maximumf %33, %34 : vector<8x128xf32>
    %cst_20 = arith.constant 0.000000e+00 : f32
    %36 = vector.broadcast %cst_20 : f32 to vector<8x128xf32>
    %c1_i32_21 = arith.constant 1 : i32
    %37 = tpu.dynamic_rotate %27 by %c1_i32_21 dim 1 : vector<8x128xf32>, i32 -> vector<8x128xf32>
    %c2_i32 = arith.constant 2 : i32
    %38 = vector.broadcast %c2_i32 : i32 to vector<1x128xi32>
    %39 = arith.muli %38, %16 : vector<1x128xi32>
    %c-2_i32 = arith.constant -2 : i32
    %40 = vector.broadcast %c-2_i32 : i32 to vector<1x128xi32>
    %41 = arith.addi %39, %40 : vector<1x128xi32>
    %c0_i32_22 = arith.constant 0 : i32
    %42 = vector.broadcast %c0_i32_22 : i32 to vector<1x128xi32>
    %43 = arith.cmpi sge, %41, %42 : vector<1x128xi32>
    %c16_i32 = arith.constant 16 : i32
    %44 = vector.broadcast %c16_i32 : i32 to vector<1x128xi32>
    %45 = arith.cmpi slt, %41, %44 : vector<1x128xi32>
    %46 = arith.andi %43, %45 : vector<1x128xi1>
    %47 = arith.extui %46 : vector<1x128xi1> to vector<1x128xi32>
    %48 = arith.sitofp %47 : vector<1x128xi32> to vector<1x128xf32>
    %49 = vector.extract_strided_slice %19 {offsets = [0, 0], sizes = [8, 1], strides = [1, 1]} : vector<8x5xf32> to vector<8x1xf32>
    %50 = vector.broadcast %48 : vector<1x128xf32> to vector<8x128xf32>
    %51 = arith.mulf %37, %50 : vector<8x128xf32>
    %52 = vector.broadcast %49 : vector<8x1xf32> to vector<8x128xf32>
    %53 = arith.mulf %52, %51 : vector<8x128xf32>
    %54 = arith.addf %36, %53 : vector<8x128xf32>
    %c1_i32_23 = arith.constant 1 : i32
    %55 = tpu.dynamic_rotate %35 by %c1_i32_23 dim 1 : vector<8x128xf32>, i32 -> vector<8x128xf32>
    %c2_i32_24 = arith.constant 2 : i32
    %56 = vector.broadcast %c2_i32_24 : i32 to vector<1x128xi32>
    %57 = arith.muli %56, %16 : vector<1x128xi32>
    %c-1_i32 = arith.constant -1 : i32
    %58 = vector.broadcast %c-1_i32 : i32 to vector<1x128xi32>
    %59 = arith.addi %57, %58 : vector<1x128xi32>
    %c0_i32_25 = arith.constant 0 : i32
    %60 = vector.broadcast %c0_i32_25 : i32 to vector<1x128xi32>
    %61 = arith.cmpi sge, %59, %60 : vector<1x128xi32>
    %c16_i32_26 = arith.constant 16 : i32
    %62 = vector.broadcast %c16_i32_26 : i32 to vector<1x128xi32>
    %63 = arith.cmpi slt, %59, %62 : vector<1x128xi32>
    %64 = arith.andi %61, %63 : vector<1x128xi1>
    %65 = arith.extui %64 : vector<1x128xi1> to vector<1x128xi32>
    %66 = arith.sitofp %65 : vector<1x128xi32> to vector<1x128xf32>
    %67 = vector.extract_strided_slice %19 {offsets = [0, 1], sizes = [8, 1], strides = [1, 1]} : vector<8x5xf32> to vector<8x1xf32>
    %68 = vector.broadcast %66 : vector<1x128xf32> to vector<8x128xf32>
    %69 = arith.mulf %55, %68 : vector<8x128xf32>
    %70 = vector.broadcast %67 : vector<8x1xf32> to vector<8x128xf32>
    %71 = arith.mulf %70, %69 : vector<8x128xf32>
    %72 = arith.addf %54, %71 : vector<8x128xf32>
    %c2_i32_27 = arith.constant 2 : i32
    %73 = vector.broadcast %c2_i32_27 : i32 to vector<1x128xi32>
    %74 = arith.muli %73, %16 : vector<1x128xi32>
    %c0_i32_28 = arith.constant 0 : i32
    %75 = vector.broadcast %c0_i32_28 : i32 to vector<1x128xi32>
    %76 = arith.addi %74, %75 : vector<1x128xi32>
    %c0_i32_29 = arith.constant 0 : i32
    %77 = vector.broadcast %c0_i32_29 : i32 to vector<1x128xi32>
    %78 = arith.cmpi sge, %76, %77 : vector<1x128xi32>
    %c16_i32_30 = arith.constant 16 : i32
    %79 = vector.broadcast %c16_i32_30 : i32 to vector<1x128xi32>
    %80 = arith.cmpi slt, %76, %79 : vector<1x128xi32>
    %81 = arith.andi %78, %80 : vector<1x128xi1>
    %82 = arith.extui %81 : vector<1x128xi1> to vector<1x128xi32>
    %83 = arith.sitofp %82 : vector<1x128xi32> to vector<1x128xf32>
    %84 = vector.extract_strided_slice %19 {offsets = [0, 2], sizes = [8, 1], strides = [1, 1]} : vector<8x5xf32> to vector<8x1xf32>
    %85 = vector.broadcast %83 : vector<1x128xf32> to vector<8x128xf32>
    %86 = arith.mulf %27, %85 : vector<8x128xf32>
    %87 = vector.broadcast %84 : vector<8x1xf32> to vector<8x128xf32>
    %88 = arith.mulf %87, %86 : vector<8x128xf32>
    %89 = arith.addf %72, %88 : vector<8x128xf32>
    %c2_i32_31 = arith.constant 2 : i32
    %90 = vector.broadcast %c2_i32_31 : i32 to vector<1x128xi32>
    %91 = arith.muli %90, %16 : vector<1x128xi32>
    %c1_i32_32 = arith.constant 1 : i32
    %92 = vector.broadcast %c1_i32_32 : i32 to vector<1x128xi32>
    %93 = arith.addi %91, %92 : vector<1x128xi32>
    %c0_i32_33 = arith.constant 0 : i32
    %94 = vector.broadcast %c0_i32_33 : i32 to vector<1x128xi32>
    %95 = arith.cmpi sge, %93, %94 : vector<1x128xi32>
    %c16_i32_34 = arith.constant 16 : i32
    %96 = vector.broadcast %c16_i32_34 : i32 to vector<1x128xi32>
    %97 = arith.cmpi slt, %93, %96 : vector<1x128xi32>
    %98 = arith.andi %95, %97 : vector<1x128xi1>
    %99 = arith.extui %98 : vector<1x128xi1> to vector<1x128xi32>
    %100 = arith.sitofp %99 : vector<1x128xi32> to vector<1x128xf32>
    %101 = vector.extract_strided_slice %19 {offsets = [0, 3], sizes = [8, 1], strides = [1, 1]} : vector<8x5xf32> to vector<8x1xf32>
    %102 = vector.broadcast %100 : vector<1x128xf32> to vector<8x128xf32>
    %103 = arith.mulf %35, %102 : vector<8x128xf32>
    %104 = vector.broadcast %101 : vector<8x1xf32> to vector<8x128xf32>
    %105 = arith.mulf %104, %103 : vector<8x128xf32>
    %106 = arith.addf %89, %105 : vector<8x128xf32>
    %c127_i32 = arith.constant 127 : i32
    %107 = tpu.dynamic_rotate %27 by %c127_i32 dim 1 : vector<8x128xf32>, i32 -> vector<8x128xf32>
    %c2_i32_35 = arith.constant 2 : i32
    %108 = vector.broadcast %c2_i32_35 : i32 to vector<1x128xi32>
    %109 = arith.muli %108, %16 : vector<1x128xi32>
    %c2_i32_36 = arith.constant 2 : i32
    %110 = vector.broadcast %c2_i32_36 : i32 to vector<1x128xi32>
    %111 = arith.addi %109, %110 : vector<1x128xi32>
    %c0_i32_37 = arith.constant 0 : i32
    %112 = vector.broadcast %c0_i32_37 : i32 to vector<1x128xi32>
    %113 = arith.cmpi sge, %111, %112 : vector<1x128xi32>
    %c16_i32_38 = arith.constant 16 : i32
    %114 = vector.broadcast %c16_i32_38 : i32 to vector<1x128xi32>
    %115 = arith.cmpi slt, %111, %114 : vector<1x128xi32>
    %116 = arith.andi %113, %115 : vector<1x128xi1>
    %117 = arith.extui %116 : vector<1x128xi1> to vector<1x128xi32>
    %118 = arith.sitofp %117 : vector<1x128xi32> to vector<1x128xf32>
    %119 = vector.extract_strided_slice %19 {offsets = [0, 4], sizes = [8, 1], strides = [1, 1]} : vector<8x5xf32> to vector<8x1xf32>
    %120 = vector.broadcast %118 : vector<1x128xf32> to vector<8x128xf32>
    %121 = arith.mulf %107, %120 : vector<8x128xf32>
    %122 = vector.broadcast %119 : vector<8x1xf32> to vector<8x128xf32>
    %123 = arith.mulf %122, %121 : vector<8x128xf32>
    %124 = arith.addf %106, %123 : vector<8x128xf32>
    %125 = vector.broadcast %18 : vector<8x1xf32> to vector<8x128xf32>
    %126 = arith.addf %124, %125 : vector<8x128xf32>
    %cst_39 = arith.constant 0.000000e+00 : f32
    %127 = vector.broadcast %cst_39 : f32 to vector<8x128xf32>
    %128 = arith.maximumf %126, %127 : vector<8x128xf32>
    %c0_40 = arith.constant 0 : index
    %c0_41 = arith.constant 0 : index
    %129 = vector.load %arg6[%c0_40, %c0_41] : memref<8x128xf32, #tpu.memory_space<vmem>>, vector<8x128xf32>
    tpu.vector_store %arg6[%c0_40, %c0_41], %128 {strides = array<i32>} : memref<8x128xf32, #tpu.memory_space<vmem>>, vector<8x128xf32>,
    return
  }
  func.func @transform_0(%arg0: i32) -> (i32, i32, i32) {
    %c0_i32 = arith.constant 0 : i32
    %c0_i32_0 = arith.constant 0 : i32
    %c0_i32_1 = arith.constant 0 : i32
    return %c0_i32, %c0_i32_0, %arg0 : i32, i32, i32
  }
  func.func @transform_1(%arg0: i32) -> (i32, i32) {
    %c0_i32 = arith.constant 0 : i32
    %c0_i32_0 = arith.constant 0 : i32
    %c0_i32_1 = arith.constant 0 : i32
    return %c0_i32, %c0_i32_0 : i32, i32
  }
  func.func @transform_2(%arg0: i32) -> (i32, i32) {
    %c0_i32 = arith.constant 0 : i32
    %c0_i32_0 = arith.constant 0 : i32
    %c0_i32_1 = arith.constant 0 : i32
    return %c0_i32, %c0_i32_0 : i32, i32
  }
  func.func @transform_3(%arg0: i32) -> (i32, i32) {
    %c0_i32 = arith.constant 0 : i32
    %c0_i32_0 = arith.constant 0 : i32
    %c0_i32_1 = arith.constant 0 : i32
    return %c0_i32, %c0_i32_0 : i32, i32
  }
  func.func @transform_4(%arg0: i32) -> (i32, i32) {
    %c0_i32 = arith.constant 0 : i32
    %c0_i32_0 = arith.constant 0 : i32
    %c0_i32_1 = arith.constant 0 : i32
    return %c0_i32, %c0_i32_0 : i32, i32
  }
  func.func @transform_5(%arg0: i32) -> (i32, i32) {
    %c0_i32 = arith.constant 0 : i32
    %c0_i32_0 = arith.constant 0 : i32
    return %c0_i32, %arg0 : i32, i32
  }
}

</mosaic_0001>

<llo_original>
// kernel: tpu_custom_call.1
$region0: #{tpu_custom_call.1}
  #allocation0 [shape = 'u32[]', space=smem, size = 0x4, offset = 0x4, fixed_abs, tag = 'smem constant byte address 0x4 - core index']
  #allocation1 [shape = 'u32[144,128]{1,0:T(1,128)}', space=vmem, size = 0x12000, scoped, tag = 'internal scratch']
  %s0 = inlined_call_operand.vmem [shape: f32[2,4,128], index: 0, kind: input, shape index: {}]
  %s1 = inlined_call_operand.vmem [shape: f32[8,4], index: 1, kind: input, shape index: {}]
  %s2 = inlined_call_operand.vmem [shape: f32[8,1], index: 2, kind: input, shape index: {}]
  %s3 = inlined_call_operand.vmem [shape: f32[8,5], index: 3, kind: input, shape index: {}]
  %s4 = inlined_call_operand.vmem [shape: f32[8,1], index: 4, kind: input, shape index: {}]
  %s5 = inlined_call_operand.hbm [shape: f32[8,128], index: 5, kind: output, shape index: {}]
  %s6 = sld [smem:[#allocation0]]
  $region30: #{tpu_custom_call.1} parent=0
    _
  %s8 = ssub.s32 1, %s6
  %s9 = scalar_select 0, %s8, %s6
  $region1: #{tpu_custom_call.1} parent=0
    #allocation2 [shape = 'u8[4096]{0}', space=vmem, size = 0x1000, scoped, tag = 'output window, operand 0, single buffered']
    #allocation3 [shape = 's32[1]{0}', space=sflag, size = 0x4, scoped, tag = 'scoped memory for tpu_custom_call.1']
    %10 = vsyncpa [#allocation3], 0
    // Predicated region
    $region2: #{tpu_custom_call.1} parent=1 // pred_check
      _
    $region3: #{tpu_custom_call.1} parent=1 // pred_check_branch
      %12 = sbr.rel (0) target = $region5
    $region4: #{tpu_custom_call.1} parent=1 // pred_region
      _
    $region5: #{tpu_custom_call.1} parent=1 // pred_fallthru
      _
    // Predicated region
    $region6: #{tpu_custom_call.1} parent=1 // pred_check
      _
    $region7: #{tpu_custom_call.1} parent=1 // pred_check_branch
      %14 = sbr.rel (0) target = $region9
    $region8: #{tpu_custom_call.1} parent=1 // pred_region
      _
    $region9: #{tpu_custom_call.1} parent=1 // pred_fallthru
      _
    // Predicated region
    $region10: #{tpu_custom_call.1} parent=1 // pred_check
      _
    $region11: #{tpu_custom_call.1} parent=1 // pred_check_branch
      %16 = sbr.rel (0) target = $region13
    $region12: #{tpu_custom_call.1} parent=1 // pred_region
      _
    $region13: #{tpu_custom_call.1} parent=1 // pred_fallthru
      _
    // Predicated region
    $region14: #{tpu_custom_call.1} parent=1 // pred_check
      _
    $region15: #{tpu_custom_call.1} parent=1 // pred_check_branch
      %18 = sbr.rel (0) target = $region17
    $region16: #{tpu_custom_call.1} parent=1 // pred_region
      _
    $region17: #{tpu_custom_call.1} parent=1 // pred_fallthru
      _
    // Predicated region
    $region18: #{tpu_custom_call.1} parent=1 // pred_check
      _
    $region19: #{tpu_custom_call.1} parent=1 // pred_check_branch
      %20 = sbr.rel (0) target = $region21
    $region20: #{tpu_custom_call.1} parent=1 // pred_region
      _
    $region21: #{tpu_custom_call.1} parent=1 // pred_fallthru
      _
    %v21 = vlaneseq
    %v22 = vand.u32 %v21, 127
    %vm23 = vcmp.lt.s32.totalorder %v22, 0
    %v24 = vsub.s32 0, %v22
    %v25 = vsel %vm23, %v24, %v22
    %v26 = vshrl.u32 %v25, 3
    %v27 = vand.u32 %v25, 7
    %v28 = vsub.s32 0, %v27
    %v29 = vsel %vm23, %v28, %v27
    %vm30 = vcmp.ne.s32.totalorder %v29, 0
    %vm31 = vcmp.lt.s32.totalorder %v29, 0
    %vm32 = vmand %vm31, %vm30
    %v33 = vadd.s32 %v29, 8
    %v34 = vsel %vm32, %v33, %v29
    %v35 = vld [vmem:[%s2] sm:$0xff]
    %v36 = vld [vmem:[%s4] sm:$0xff]
    %v37 = vld [vmem:[%s3] sm:$0xff]
    %v38 = vld [vmem:[%s1] sm:$0xff]
    %v39 = vld [vmem:[%s0] sm:$0xf]
    %41 = vset.pattern.permute.xlu0 0
    %42 = vperm.xlu0 %41, %v35
    %v43 = vpop.permute.xlu0 %42
    %vm45 = vcmask 31744
    %v47 = vsel %vm45, %v38, 0
    %vm49 = vcmask 1043456
    %v51 = vsel %vm49, %v39, 0
    %53 = vmatprep.subr.mxu0 0.0
    %54 = vmatpush1.msra.mxu0 0.0
    %55 = vmatprep.subr.mxu0 0.0
    %56 = vmatpush1.msra.mxu0 0.0
    %57 = vmatprep.subr.mxu0 0.0
    %58 = vmatpush1.msra.mxu0 0.0
    %59 = vmatprep.subr.mxu0 0.0
    %60 = vmatpush1.msra.mxu0 0.0
    %61 = vmatprep.subr.mxu0 0.0
    %62 = vmatpush1.msra.mxu0 0.0
    %63 = vmatprep.subr.mxu0 0.0
    %64 = vmatpush1.msra.mxu0 0.0
    %65 = vmatprep.subr.mxu0 0.0
    %66 = vmatpush1.msra.mxu0 0.0
    %67 = vmatprep.subr.mxu0 0.0
    %68 = vmatpush1.msra.mxu0 0.0
    %69 = vmatprep.subr.mxu0 0.0
    %70 = vmatpush1.msra.mxu0 0.0
    %71 = vmatprep.subr.mxu0 0.0
    %72 = vmatpush1.msra.mxu0 0.0
    %73 = vmatprep.subr.mxu0 0.0
    %74 = vmatpush1.msra.mxu0 0.0
    %75 = vmatprep.subr.mxu0 0.0
    %76 = vmatpush1.msra.mxu0 0.0
    %77 = vmatprep.subr.mxu0 0.0
    %78 = vmatpush1.msra.mxu0 0.0
    %79 = vmatprep.subr.mxu0 0.0
    %80 = vmatpush1.msra.mxu0 0.0
    %81 = vmatprep.subr.mxu0 0.0
    %82 = vmatpush1.msra.mxu0 0.0
    %83 = vmatprep.subr.mxu0 0.0
    %84 = vmatpush1.msra.mxu0 %v51
    %85 = vmatprep.subr.mxu0 0.0
    %86 = vmatpush2.msra.mxu0 0.0
    %87 = vmatprep.subr.mxu0 0.0
    %88 = vmatpush2.msra.mxu0 0.0
    %89 = vmatprep.subr.mxu0 0.0
    %90 = vmatpush2.msra.mxu0 0.0
    %91 = vmatprep.subr.mxu0 0.0
    %92 = vmatpush2.msra.mxu0 0.0
    %93 = vmatprep.subr.mxu0 0.0
    %94 = vmatpush2.msra.mxu0 0.0
    %95 = vmatprep.subr.mxu0 0.0
    %96 = vmatpush2.msra.mxu0 0.0
    %97 = vmatprep.subr.mxu0 0.0
    %98 = vmatpush2.msra.mxu0 0.0
    %99 = vmatprep.subr.mxu0 0.0
    %100 = vmatpush2.msra.mxu0 0.0
    %101 = vmatprep.subr.mxu0 0.0
    %102 = vmatpush2.msra.mxu0 0.0
    %103 = vmatprep.subr.mxu0 0.0
    %104 = vmatpush2.msra.mxu0 0.0
    %105 = vmatprep.subr.mxu0 0.0
    %106 = vmatpush2.msra.mxu0 0.0
    %107 = vmatprep.subr.mxu0 0.0
    %108 = vmatpush2.msra.mxu0 0.0
    %109 = vmatprep.subr.mxu0 0.0
    %110 = vmatpush2.msra.mxu0 0.0
    %111 = vmatprep.subr.mxu0 0.0
    %112 = vmatpush2.msra.mxu0 0.0
    %113 = vmatprep.subr.mxu0 0.0
    %114 = vmatpush2.msra.mxu0 0.0
    %115 = vmatprep.subr.mxu0 0.0
    %116 = vmatpush2.msra.mxu0 0.0
    %117 = vmatprep.mubr.f32.mxu0 0.0
    %118 = vmatmul.mubr.f32.gmra.mxu0 %v47
    %v119 = vpop.f32.mrf.mxu0
    %v120 = vadd.f32 %v43, %v119
    %v121 = vpop.f32.mrf.mxu0
    %122 = vdwg.mxu0
    %v123 = vmax.f32 %v120, 0.0
    %s124 = scalar_lea.vmem %s0, 4
    %v125 = vld [vmem:[%s124] sm:$0xf]
    %v127 = vsel %vm49, %v125, 0
    %129 = vmatprep.subr.mxu0 0.0
    %130 = vmatpush1.msra.mxu0 0.0
    %131 = vmatprep.subr.mxu0 0.0
    %132 = vmatpush1.msra.mxu0 0.0
    %133 = vmatprep.subr.mxu0 0.0
    %134 = vmatpush1.msra.mxu0 0.0
    %135 = vmatprep.subr.mxu0 0.0
    %136 = vmatpush1.msra.mxu0 0.0
    %137 = vmatprep.subr.mxu0 0.0
    %138 = vmatpush1.msra.mxu0 0.0
    %139 = vmatprep.subr.mxu0 0.0
    %140 = vmatpush1.msra.mxu0 0.0
    %141 = vmatprep.subr.mxu0 0.0
    %142 = vmatpush1.msra.mxu0 0.0
    %143 = vmatprep.subr.mxu0 0.0
    %144 = vmatpush1.msra.mxu0 0.0
    %145 = vmatprep.subr.mxu0 0.0
    %146 = vmatpush1.msra.mxu0 0.0
    %147 = vmatprep.subr.mxu0 0.0
    %148 = vmatpush1.msra.mxu0 0.0
    %149 = vmatprep.subr.mxu0 0.0
    %150 = vmatpush1.msra.mxu0 0.0
    %151 = vmatprep.subr.mxu0 0.0
    %152 = vmatpush1.msra.mxu0 0.0
    %153 = vmatprep.subr.mxu0 0.0
    %154 = vmatpush1.msra.mxu0 0.0
    %155 = vmatprep.subr.mxu0 0.0
    %156 = vmatpush1.msra.mxu0 0.0
    %157 = vmatprep.subr.mxu0 0.0
    %158 = vmatpush1.msra.mxu0 0.0
    %159 = vmatprep.subr.mxu0 0.0
    %160 = vmatpush1.msra.mxu0 %v127
    %161 = vmatprep.subr.mxu0 0.0
    %162 = vmatpush2.msra.mxu0 0.0
    %163 = vmatprep.subr.mxu0 0.0
    %164 = vmatpush2.msra.mxu0 0.0
    %165 = vmatprep.subr.mxu0 0.0
    %166 = vmatpush2.msra.mxu0 0.0
    %167 = vmatprep.subr.mxu0 0.0
    %168 = vmatpush2.msra.mxu0 0.0
    %169 = vmatprep.subr.mxu0 0.0
    %170 = vmatpush2.msra.mxu0 0.0
    %171 = vmatprep.subr.mxu0 0.0
    %172 = vmatpush2.msra.mxu0 0.0
    %173 = vmatprep.subr.mxu0 0.0
    %174 = vmatpush2.msra.mxu0 0.0
    %175 = vmatprep.subr.mxu0 0.0
    %176 = vmatpush2.msra.mxu0 0.0
    %177 = vmatprep.subr.mxu0 0.0
    %178 = vmatpush2.msra.mxu0 0.0
    %179 = vmatprep.subr.mxu0 0.0
    %180 = vmatpush2.msra.mxu0 0.0
    %181 = vmatprep.subr.mxu0 0.0
    %182 = vmatpush2.msra.mxu0 0.0
    %183 = vmatprep.subr.mxu0 0.0
    %184 = vmatpush2.msra.mxu0 0.0
    %185 = vmatprep.subr.mxu0 0.0
    %186 = vmatpush2.msra.mxu0 0.0
    %187 = vmatprep.subr.mxu0 0.0
    %188 = vmatpush2.msra.mxu0 0.0
    %189 = vmatprep.subr.mxu0 0.0
    %190 = vmatpush2.msra.mxu0 0.0
    %191 = vmatprep.subr.mxu0 0.0
    %192 = vmatpush2.msra.mxu0 0.0
    %193 = vmatprep.mubr.f32.mxu0 0.0
    %194 = vmatmul.mubr.f32.gmra.mxu0 %v47
    %v195 = vpop.f32.mrf.mxu0
    %v196 = vadd.f32 %v43, %v195
    %v197 = vpop.f32.mrf.mxu0
    %198 = vdwg.mxu0
    %v199 = vmax.f32 %v196, 0.0
    %200 = vrot.lane.b32.xlu0 %v123, 1
    %v201 = vpop.permute.xlu0 %200
    %v202 = vmul.u32 %v34, 2
    %v203 = vadd.s32 %v202, 4294967294
    %vm204 = vcmp.ge.s32.totalorder %v203, 0
    %vm205 = vcmp.lt.s32.totalorder %v203, 16
    %vm206 = vmand %vm204, %vm205
    %v207 = vsel %vm206, 1, 0
    %v208 = vcvt.s32.f32 %v207
    %v209 = vmul.f32 %v201, %v208
    %211 = vset.pattern.permute.xlu0 0
    %212 = vperm.xlu0 %211, %v37
    %v213 = vpop.permute.xlu0 %212
    %v215 = vmul.f32 %v213, %v209
    %v216 = vadd.f32 %v215, 0.0
    %217 = vrot.lane.b32.xlu0 %v199, 1
    %v218 = vpop.permute.xlu0 %217
    %v219 = vadd.s32 %v202, 4294967295
    %vm220 = vcmp.ge.s32.totalorder %v219, 0
    %vm221 = vcmp.lt.s32.totalorder %v219, 16
    %vm222 = vmand %vm220, %vm221
    %v223 = vsel %vm222, 1, 0
    %v224 = vcvt.s32.f32 %v223
    %v225 = vmul.f32 %v218, %v224
    %226 = vset.pattern.permute.xlu0 1
    %227 = vperm.xlu0 %226, %v37
    %v228 = vpop.permute.xlu0 %227
    %v230 = vmul.f32 %v228, %v225
    %v231 = vadd.f32 %v216, %v230
    %vm232 = vcmp.ge.s32.totalorder %v202, 0
    %vm233 = vcmp.lt.s32.totalorder %v202, 16
    %vm234 = vmand %vm232, %vm233
    %v235 = vsel %vm234, 1, 0
    %v236 = vcvt.s32.f32 %v235
    %v237 = vmul.f32 %v123, %v236
    %238 = vset.pattern.permute.xlu0 2
    %239 = vperm.xlu0 %238, %v37
    %v240 = vpop.permute.xlu0 %239
    %v242 = vmul.f32 %v240, %v237
    %v243 = vadd.f32 %v231, %v242
    %v244 = vadd.s32 %v202, 1
    %vm245 = vcmp.ge.s32.totalorder %v244, 0
    %vm246 = vcmp.lt.s32.totalorder %v244, 16
    %vm247 = vmand %vm245, %vm246
    %v248 = vsel %vm247, 1, 0
    %v249 = vcvt.s32.f32 %v248
    %v250 = vmul.f32 %v199, %v249
    %251 = vset.pattern.permute.xlu0 3
    %252 = vperm.xlu0 %251, %v37
    %v253 = vpop.permute.xlu0 %252
    %v255 = vmul.f32 %v253, %v250
    %v256 = vadd.f32 %v243, %v255
    %257 = vrot.lane.b32.xlu0 %v123, 127
    %v258 = vpop.permute.xlu0 %257
    %v259 = vadd.s32 %v202, 2
    %vm260 = vcmp.ge.s32.totalorder %v259, 0
    %vm261 = vcmp.lt.s32.totalorder %v259, 16
    %vm262 = vmand %vm260, %vm261
    %v263 = vsel %vm262, 1, 0
    %v264 = vcvt.s32.f32 %v263
    %v265 = vmul.f32 %v258, %v264
    %266 = vset.pattern.permute.xlu0 4
    %267 = vperm.xlu0 %266, %v37
    %v268 = vpop.permute.xlu0 %267
    %v270 = vmul.f32 %v268, %v265
    %v271 = vadd.f32 %v256, %v270
    %273 = vset.pattern.permute.xlu0 0
    %274 = vperm.xlu0 %273, %v36
    %v275 = vpop.permute.xlu0 %274
    %v277 = vadd.f32 %v271, %v275
    %v278 = vmax.f32 %v277, 0.0
    %279 = vst [vmem:[#allocation2] sm:$0xff] %v278
    // Predicated region
    $region22: #{tpu_custom_call.1} parent=1 // pred_check
      _
    $region23: #{tpu_custom_call.1} parent=1 // pred_check_branch
      %281 = sbr.rel (0) target = $region25
    $region24: #{tpu_custom_call.1} parent=1 // pred_region
      %s283 = ssub.s32 128, 128
      %284 = vsyncadd [#allocation3], %s283
      %s286 = sshll.u32 [#allocation2], 4
      %s287 = int_to_ptr.vmem [resolvable:$true] %s286
      %289 = dma.vmem_to_hbm [thread:$0]  %s287, 128, %s5, [#allocation3]
    $region25: #{tpu_custom_call.1} parent=1 // pred_fallthru
      _
    // Predicated region
    $region26: #{tpu_custom_call.1} parent=1 // pred_check
      _
    $region27: #{tpu_custom_call.1} parent=1 // pred_check_branch
      %291 = sbr.rel (0) target = $region29
    $region28: #{tpu_custom_call.1} parent=1 // pred_region
      %292 = dma.done [#allocation3], 128
    $region29: #{tpu_custom_call.1} parent=1 // pred_fallthru
      _
    %293 = vsyncpa [#allocation3], 1

</llo_original>
